<compile_context>
chip_gen: v5e
topology: v5e:2x2
jax: 0.10.0
libtpu: 0.0.40
codegen_flags: <defaults>
</compile_context>

<pallas_src>
import functools

import jax
import jax.numpy as jnp
from jax import lax
from jax.experimental import pallas as pl
from jax.experimental.pallas import tpu as pltpu


def _full_spec(shape):
    zeros = (0,) * len(shape)
    return pl.BlockSpec(shape, lambda n, _z=zeros: _z)


def _im2col_3x3(x_f32, H, W, row_ok, col_ok):
    """Build the (9*C, H*W) bf16 im2col matrix for a 3x3 / pad-1 conv.

    x_f32: (C, H*W) f32 flat image.  Zero padding is emulated by lane-rolling
    the flat grid (pltpu.roll -> XLU) and zeroing out-of-bounds taps with
    row/column boundary masks.  Tap order is ky-major, kx-minor, channel-minor
    (matches weights reshaped from (Cout, 3, 3, C) to (Cout, 9*C)).
    """
    HW = H * W
    parts = []
    for dy in (-1, 0, 1):
        for dx in (-1, 0, 1):
            off = dy * W + dx
            v = x_f32 if off == 0 else pltpu.roll(x_f32, shift=(-off) % HW, axis=1)
            m = None
            if row_ok[dy] is not None:
                m = row_ok[dy]
            if col_ok[dx] is not None:
                m = col_ok[dx] if m is None else jnp.logical_and(m, col_ok[dx])
            if m is not None:
                v = jnp.where(m, v, 0.0)        # (1, HW) mask broadcast over C
            parts.append(v.astype(jnp.bfloat16))
    return jnp.concatenate(parts, axis=0)        # (9*C, HW)


def _basic_block_kernel(x_ref, w1_ref, b1_ref, w2_ref, b2_ref, *rest,
                        H, W, has_proj):
    if has_proj:
        ws_ref, bs_ref, out_ref = rest
    else:
        (out_ref,) = rest

    f32 = jnp.float32
    HW = H * W

    x = x_ref[0, :, :]                           # (Cin, HW) f32, lane-dense

    # Pixel row / column indices on the flat grid (for the padding masks).
    pos = lax.broadcasted_iota(jnp.int32, (1, HW), 1)
    if W & (W - 1) == 0:                         # power-of-two W: no integer div
        col = pos & (W - 1)
        row = pos >> (W.bit_length() - 1)
    else:
        col = pos % W
        row = pos // W
    row_ok = {-1: row >= 1, 0: None, 1: row <= H - 2}
    col_ok = {-1: col >= 1, 0: None, 1: col <= W - 2}

    # ---- conv1 (3x3, pad 1) + BN1 (scale folded into w1) + ReLU ----
    cols1 = _im2col_3x3(x, H, W, row_ok, col_ok)                 # (9*Cin, HW) bf16
    h1 = jnp.dot(w1_ref[...], cols1, preferred_element_type=f32)  # (Cout, HW) f32
    h1 = jnp.maximum(h1 + b1_ref[...], 0.0)

    # ---- conv2 (3x3, pad 1) + BN2 ----
    cols2 = _im2col_3x3(h1, H, W, row_ok, col_ok)                # (9*Cout, HW) bf16
    h2 = jnp.dot(w2_ref[...], cols2, preferred_element_type=f32) + b2_ref[...]

    # ---- shortcut: 1x1 projection + BN, or f32 identity ----
    if has_proj:
        sc = jnp.dot(ws_ref[...], x.astype(jnp.bfloat16),
                     preferred_element_type=f32) + bs_ref[...]
    else:
        sc = x                                                    # Cin == Cout

    # One unmasked lane-dense store of the whole (Cout, HW) tile.
    out_ref[0, :, :] = jnp.maximum(h2 + sc, 0.0).astype(out_ref.dtype)


def basic_block_forward(x_nchw, params, in_channels, out_channels, strides=(1, 1)):
    s1, s2 = strides
    if (s1, s2) != (1, 1):
        # TODO(synk): strided (downsampling) variants are not fused; XLA path.
        return ref_basic_block(x_nchw, params, in_channels, out_channels, strides)

    N, C, H, W = x_nchw.shape
    assert C == in_channels
    Cin, Cout = in_channels, out_channels
    has_proj = Cin != Cout
    HW = H * W

    f32, bf16 = jnp.float32, jnp.bfloat16

    # Fold BN scale into the bf16 matmul weights; biases stay f32.
    w1m = jnp.transpose(params["w1"], (3, 0, 1, 2)).reshape(Cout, 9 * Cin)
    w1m = (w1m * params["bn1_scale"][:, None]).astype(bf16)
    b1 = params["bn1_bias"].reshape(Cout, 1).astype(f32)
    w2m = jnp.transpose(params["w2"], (3, 0, 1, 2)).reshape(Cout, 9 * Cout)
    w2m = (w2m * params["bn2_scale"][:, None]).astype(bf16)
    b2 = params["bn2_bias"].reshape(Cout, 1).astype(f32)

    # Metadata-only reshape to a lane-dense (N, Cin, H*W) layout.
    x_flat = x_nchw.reshape(N, Cin, HW).astype(f32)

    args = [x_flat, w1m, b1, w2m, b2]
    in_specs = [
        pl.BlockSpec((1, Cin, HW), lambda n: (n, 0, 0)),
        _full_spec((Cout, 9 * Cin)), _full_spec((Cout, 1)),
        _full_spec((Cout, 9 * Cout)), _full_spec((Cout, 1)),
    ]
    if has_proj:
        wsm = (jnp.transpose(params["ws"], (1, 0))
               * params["bns_scale"][:, None]).astype(bf16)       # (Cout, Cin)
        bs = params["bns_bias"].reshape(Cout, 1).astype(f32)
        args += [wsm, bs]
        in_specs += [_full_spec((Cout, Cin)), _full_spec((Cout, 1))]

    kernel = functools.partial(_basic_block_kernel, H=H, W=W, has_proj=has_proj)

    out_flat = pl.pallas_call(
        kernel,
        out_shape=jax.ShapeDtypeStruct((N, Cout, HW), f32),
        grid=(N,),
        in_specs=in_specs,
        out_specs=pl.BlockSpec((1, Cout, HW), lambda n: (n, 0, 0)),
        compiler_params=pltpu.CompilerParams(dimension_semantics=("parallel",)),
    )(*args)

    # Metadata-only reshape back to NCHW.
    return out_flat.reshape(N, Cout, H, W)


def init_basic_block_params(key, in_channels, out_channels, strides=(1, 1)):
    """Deterministic synthetic parameters (conv weights HWIO, eval-mode BN folded)."""
    eps = 1e-5
    Cin, Cout = in_channels, out_channels
    has_proj = (strides[0] != 1) or (Cin != Cout)
    keys = jax.random.split(key, 16)

    def conv_w(k, kh, kw, cin, cout):
        fan_in = kh * kw * cin
        return (jax.random.normal(k, (kh, kw, cin, cout), jnp.float32)
                / jnp.sqrt(float(fan_in)))

    def bn_fold(kg, kb, km, kv, c):
        gamma = 1.0 + 0.1 * jax.random.normal(kg, (c,), jnp.float32)
        beta = 0.1 * jax.random.normal(kb, (c,), jnp.float32)
        mean = 0.1 * jax.random.normal(km, (c,), jnp.float32)
        var = jax.random.uniform(kv, (c,), jnp.float32, minval=0.5, maxval=1.5)
        scale = gamma / jnp.sqrt(var + eps)
        bias = beta - mean * scale
        return scale, bias

    p = {"w1": conv_w(keys[0], 3, 3, Cin, Cout)}
    p["bn1_scale"], p["bn1_bias"] = bn_fold(keys[1], keys[2], keys[3], keys[4], Cout)
    p["w2"] = conv_w(keys[5], 3, 3, Cout, Cout)
    p["bn2_scale"], p["bn2_bias"] = bn_fold(keys[6], keys[7], keys[8], keys[9], Cout)
    if has_proj:
        p["ws"] = conv_w(keys[10], 1, 1, Cin, Cout)[0, 0]          # (Cin, Cout)
        p["bns_scale"], p["bns_bias"] = bn_fold(keys[11], keys[12], keys[13],
                                                keys[14], Cout)
    return p


def ref_basic_block(x_nchw, params, in_channels, out_channels, strides=(1, 1)):
    """Pure-JAX (XLA, f32) reference with the PyTorch module's math (eval BN)."""
    s1, s2 = strides
    dn = ("NCHW", "HWIO", "NCHW")
    x = x_nchw.astype(jnp.float32)

    def conv(v, w, s, p):
        return jax.lax.conv_general_dilated(
            v, w, (s, s), [(p, p), (p, p)], dimension_numbers=dn)

    def bn(v, scale, bias):
        return v * scale.reshape(1, -1, 1, 1) + bias.reshape(1, -1, 1, 1)

    h = jnp.maximum(bn(conv(x, params["w1"], s1, 1),
                       params["bn1_scale"], params["bn1_bias"]), 0.0)
    h = bn(conv(h, params["w2"], s2, 1), params["bn2_scale"], params["bn2_bias"])
    if (s1 != 1) or (in_channels != out_channels):
        sc = bn(conv(x, params["ws"].reshape(1, 1, in_channels, out_channels), s1, 0),
                params["bns_scale"], params["bns_bias"])
    else:
        sc = x
    return jnp.maximum(h + sc, 0.0)


if __name__ == "__main__":
    key = jax.random.PRNGKey(0)
    kx, kp, kx2, kp2 = jax.random.split(key, 4)

    # Tolerances account for bf16 MXU operands (f32 accumulation) vs f32 ref.
    ATOL, RTOL = 3e-2, 3e-2

    # Config 1: projection shortcut (Cin != Cout), stride (1, 1).
    N, Cin, H, W = 2, 4, 16, 16
    Cout = 8
    x = jax.random.normal(kx, (N, Cin, H, W), jnp.float32)
    params = init_basic_block_params(kp, Cin, Cout, (1, 1))
    y = jax.block_until_ready(basic_block_forward(x, params, Cin, Cout, (1, 1)))
    assert y.shape == (N, Cout, H, W), y.shape
    y_ref = ref_basic_block(x, params, Cin, Cout, (1, 1))
    err = float(jnp.max(jnp.abs(y - y_ref)))
    assert jnp.allclose(y, y_ref, atol=ATOL, rtol=RTOL), err

    # Config 2: identity shortcut (Cin == Cout), stride (1, 1).
    C2 = 8
    x2 = jax.random.normal(kx2, (N, C2, H, W), jnp.float32)
    params2 = init_basic_block_params(kp2, C2, C2, (1, 1))
    y2 = jax.block_until_ready(basic_block_forward(x2, params2, C2, C2, (1, 1)))
    assert y2.shape == (N, C2, H, W), y2.shape
    y2_ref = ref_basic_block(x2, params2, C2, C2, (1, 1))
    err2 = float(jnp.max(jnp.abs(y2 - y2_ref)))
    assert jnp.allclose(y2, y2_ref, atol=ATOL, rtol=RTOL), err2

    print("KERNEL_OK")
</pallas_src>

<mosaic_0001>
module attributes {stable_mosaic.version = 11 : i64} {
  func.func @_basic_block_kernel(%arg0: i32, %arg1: memref<1x4x256xf32, #tpu.memory_space<vmem>>, %arg2: memref<8x36xbf16, #tpu.memory_space<vmem>>, %arg3: memref<8x1xf32, #tpu.memory_space<vmem>>, %arg4: memref<8x72xbf16, #tpu.memory_space<vmem>>, %arg5: memref<8x1xf32, #tpu.memory_space<vmem>>, %arg6: memref<8x4xbf16, #tpu.memory_space<vmem>>, %arg7: memref<8x1xf32, #tpu.memory_space<vmem>>, %arg8: memref<1x8x256xf32, #tpu.memory_space<vmem>>) attributes {dimension_semantics = [#tpu.dimension_semantics<parallel>], iteration_bounds = array<i64: 2>, scalar_prefetch = 0 : i64, scratch_operands = 0 : i64, tpu.core_type = #tpu.core_type<tc>, window_params = [{transform_indices = @transform_0, window_bounds = array<i64: 1, 4, 256>}, {pipeline_mode = #tpu.pipeline_mode<synchronous>, transform_indices = @transform_1, window_bounds = array<i64: 8, 36>}, {pipeline_mode = #tpu.pipeline_mode<synchronous>, transform_indices = @transform_2, window_bounds = array<i64: 8, 1>}, {pipeline_mode = #tpu.pipeline_mode<synchronous>, transform_indices = @transform_3, window_bounds = array<i64: 8, 72>}, {pipeline_mode = #tpu.pipeline_mode<synchronous>, transform_indices = @transform_4, window_bounds = array<i64: 8, 1>}, {pipeline_mode = #tpu.pipeline_mode<synchronous>, transform_indices = @transform_5, window_bounds = array<i64: 8, 4>}, {pipeline_mode = #tpu.pipeline_mode<synchronous>, transform_indices = @transform_6, window_bounds = array<i64: 8, 1>}, {transform_indices = @transform_7, window_bounds = array<i64: 1, 8, 256>}]} {
    %c0 = arith.constant 0 : index
    %c0_0 = arith.constant 0 : index
    %c0_1 = arith.constant 0 : index
    %0 = vector.load %arg1[%c0, %c0_0, %c0_1] : memref<1x4x256xf32, #tpu.memory_space<vmem>>, vector<1x4x256xf32>
    %1 = vector.shape_cast %0 : vector<1x4x256xf32> to vector<4x256xf32>
    %2 = tpu.iota {dimensions = array<i32: 1>} : vector<1x256xi32>
    %c15_i32 = arith.constant 15 : i32
    %3 = vector.broadcast %c15_i32 : i32 to vector<1x256xi32>
    %4 = arith.andi %2, %3 : vector<1x256xi32>
    %c4_i32 = arith.constant 4 : i32
    %5 = vector.broadcast %c4_i32 : i32 to vector<1x256xi32>
    %6 = arith.shrsi %2, %5 : vector<1x256xi32>
    %c1_i32 = arith.constant 1 : i32
    %7 = vector.broadcast %c1_i32 : i32 to vector<1x256xi32>
    %8 = arith.cmpi sge, %6, %7 : vector<1x256xi32>
    %c14_i32 = arith.constant 14 : i32
    %9 = vector.broadcast %c14_i32 : i32 to vector<1x256xi32>
    %10 = arith.cmpi sle, %6, %9 : vector<1x256xi32>
    %c1_i32_2 = arith.constant 1 : i32
    %11 = vector.broadcast %c1_i32_2 : i32 to vector<1x256xi32>
    %12 = arith.cmpi sge, %4, %11 : vector<1x256xi32>
    %c14_i32_3 = arith.constant 14 : i32
    %13 = vector.broadcast %c14_i32_3 : i32 to vector<1x256xi32>
    %14 = arith.cmpi sle, %4, %13 : vector<1x256xi32>
    %c17_i32 = arith.constant 17 : i32
    %15 = tpu.dynamic_rotate %1 by %c17_i32 dim 1 : vector<4x256xf32>, i32 -> vector<4x256xf32>
    %16 = arith.andi %8, %12 : vector<1x256xi1>
    %cst = arith.constant 0.000000e+00 : f32
    %17 = vector.shape_cast %16 : vector<1x256xi1> to vector<1x256xi1>
    %18 = vector.broadcast %17 : vector<1x256xi1> to vector<4x256xi1>
    %19 = vector.broadcast %cst : f32 to vector<4x256xf32>
    %20 = arith.select %18, %15, %19 : vector<4x256xi1>, vector<4x256xf32>
    %21 = arith.truncf %20 : vector<4x256xf32> to vector<4x256xbf16>
    %c16_i32 = arith.constant 16 : i32
    %22 = tpu.dynamic_rotate %1 by %c16_i32 dim 1 : vector<4x256xf32>, i32 -> vector<4x256xf32>
    %cst_4 = arith.constant 0.000000e+00 : f32
    %23 = vector.shape_cast %8 : vector<1x256xi1> to vector<1x256xi1>
    %24 = vector.broadcast %23 : vector<1x256xi1> to vector<4x256xi1>
    %25 = vector.broadcast %cst_4 : f32 to vector<4x256xf32>
    %26 = arith.select %24, %22, %25 : vector<4x256xi1>, vector<4x256xf32>
    %27 = arith.truncf %26 : vector<4x256xf32> to vector<4x256xbf16>
    %c15_i32_5 = arith.constant 15 : i32
    %28 = tpu.dynamic_rotate %1 by %c15_i32_5 dim 1 : vector<4x256xf32>, i32 -> vector<4x256xf32>
    %29 = arith.andi %8, %14 : vector<1x256xi1>
    %cst_6 = arith.constant 0.000000e+00 : f32
    %30 = vector.shape_cast %29 : vector<1x256xi1> to vector<1x256xi1>
    %31 = vector.broadcast %30 : vector<1x256xi1> to vector<4x256xi1>
    %32 = vector.broadcast %cst_6 : f32 to vector<4x256xf32>
    %33 = arith.select %31, %28, %32 : vector<4x256xi1>, vector<4x256xf32>
    %34 = arith.truncf %33 : vector<4x256xf32> to vector<4x256xbf16>
    %c1_i32_7 = arith.constant 1 : i32
    %35 = tpu.dynamic_rotate %1 by %c1_i32_7 dim 1 : vector<4x256xf32>, i32 -> vector<4x256xf32>
    %cst_8 = arith.constant 0.000000e+00 : f32
    %36 = vector.shape_cast %12 : vector<1x256xi1> to vector<1x256xi1>
    %37 = vector.broadcast %36 : vector<1x256xi1> to vector<4x256xi1>
    %38 = vector.broadcast %cst_8 : f32 to vector<4x256xf32>
    %39 = arith.select %37, %35, %38 : vector<4x256xi1>, vector<4x256xf32>
    %40 = arith.truncf %39 : vector<4x256xf32> to vector<4x256xbf16>
    %41 = arith.truncf %1 : vector<4x256xf32> to vector<4x256xbf16>
    %c255_i32 = arith.constant 255 : i32
    %42 = tpu.dynamic_rotate %1 by %c255_i32 dim 1 : vector<4x256xf32>, i32 -> vector<4x256xf32>
    %cst_9 = arith.constant 0.000000e+00 : f32
    %43 = vector.shape_cast %14 : vector<1x256xi1> to vector<1x256xi1>
    %44 = vector.broadcast %43 : vector<1x256xi1> to vector<4x256xi1>
    %45 = vector.broadcast %cst_9 : f32 to vector<4x256xf32>
    %46 = arith.select %44, %42, %45 : vector<4x256xi1>, vector<4x256xf32>
    %47 = arith.truncf %46 : vector<4x256xf32> to vector<4x256xbf16>
    %c241_i32 = arith.constant 241 : i32
    %48 = tpu.dynamic_rotate %1 by %c241_i32 dim 1 : vector<4x256xf32>, i32 -> vector<4x256xf32>
    %49 = arith.andi %10, %12 : vector<1x256xi1>
    %cst_10 = arith.constant 0.000000e+00 : f32
    %50 = vector.shape_cast %49 : vector<1x256xi1> to vector<1x256xi1>
    %51 = vector.broadcast %50 : vector<1x256xi1> to vector<4x256xi1>
    %52 = vector.broadcast %cst_10 : f32 to vector<4x256xf32>
    %53 = arith.select %51, %48, %52 : vector<4x256xi1>, vector<4x256xf32>
    %54 = arith.truncf %53 : vector<4x256xf32> to vector<4x256xbf16>
    %c240_i32 = arith.constant 240 : i32
    %55 = tpu.dynamic_rotate %1 by %c240_i32 dim 1 : vector<4x256xf32>, i32 -> vector<4x256xf32>
    %cst_11 = arith.constant 0.000000e+00 : f32
    %56 = vector.shape_cast %10 : vector<1x256xi1> to vector<1x256xi1>
    %57 = vector.broadcast %56 : vector<1x256xi1> to vector<4x256xi1>
    %58 = vector.broadcast %cst_11 : f32 to vector<4x256xf32>
    %59 = arith.select %57, %55, %58 : vector<4x256xi1>, vector<4x256xf32>
    %60 = arith.truncf %59 : vector<4x256xf32> to vector<4x256xbf16>
    %c239_i32 = arith.constant 239 : i32
    %61 = tpu.dynamic_rotate %1 by %c239_i32 dim 1 : vector<4x256xf32>, i32 -> vector<4x256xf32>
    %62 = arith.andi %10, %14 : vector<1x256xi1>
    %cst_12 = arith.constant 0.000000e+00 : f32
    %63 = vector.shape_cast %62 : vector<1x256xi1> to vector<1x256xi1>
    %64 = vector.broadcast %63 : vector<1x256xi1> to vector<4x256xi1>
    %65 = vector.broadcast %cst_12 : f32 to vector<4x256xf32>
    %66 = arith.select %64, %61, %65 : vector<4x256xi1>, vector<4x256xf32>
    %67 = arith.truncf %66 : vector<4x256xf32> to vector<4x256xbf16>
    %68 = tpu.concatenate %21, %27, %34, %40, %41, %47, %54, %60, %67 in 0 : vector<4x256xbf16>, vector<4x256xbf16>, vector<4x256xbf16>, vector<4x256xbf16>, vector<4x256xbf16>, vector<4x256xbf16>, vector<4x256xbf16>, vector<4x256xbf16>, vector<4x256xbf16> -> vector<36x256xbf16>
    %c0_13 = arith.constant 0 : index
    %c0_14 = arith.constant 0 : index
    %69 = vector.load %arg2[%c0_13, %c0_14] : memref<8x36xbf16, #tpu.memory_space<vmem>>, vector<8x36xbf16>
    %cst_15 = arith.constant dense<0.000000e+00> : vector<8x256xf32>
    %70 = tpu.matmul %69, %68, %cst_15 {dimension_numbers = #tpu.dot_dimension_numbers<[1], [0], [0], [1], [0, 0, 1, 1], [], []>} : vector<8x36xbf16>, vector<36x256xbf16>, vector<8x256xf32> -> vector<8x256xf32>
    %c0_16 = arith.constant 0 : index
    %c0_17 = arith.constant 0 : index
    %71 = vector.load %arg3[%c0_16, %c0_17] : memref<8x1xf32, #tpu.memory_space<vmem>>, vector<8x1xf32>
    %72 = vector.broadcast %71 : vector<8x1xf32> to vector<8x256xf32>
    %73 = arith.addf %70, %72 : vector<8x256xf32>
    %cst_18 = arith.constant 0.000000e+00 : f32
    %74 = vector.broadcast %cst_18 : f32 to vector<8x256xf32>
    %75 = arith.maximumf %73, %74 : vector<8x256xf32>
    %c17_i32_19 = arith.constant 17 : i32
    %76 = tpu.dynamic_rotate %75 by %c17_i32_19 dim 1 : vector<8x256xf32>, i32 -> vector<8x256xf32>
    %77 = arith.andi %8, %12 : vector<1x256xi1>
    %cst_20 = arith.constant 0.000000e+00 : f32
    %78 = vector.shape_cast %77 : vector<1x256xi1> to vector<1x256xi1>
    %79 = vector.broadcast %78 : vector<1x256xi1> to vector<8x256xi1>
    %80 = vector.broadcast %cst_20 : f32 to vector<8x256xf32>
    %81 = arith.select %79, %76, %80 : vector<8x256xi1>, vector<8x256xf32>
    %82 = arith.truncf %81 : vector<8x256xf32> to vector<8x256xbf16>
    %c16_i32_21 = arith.constant 16 : i32
    %83 = tpu.dynamic_rotate %75 by %c16_i32_21 dim 1 : vector<8x256xf32>, i32 -> vector<8x256xf32>
    %cst_22 = arith.constant 0.000000e+00 : f32
    %84 = vector.shape_cast %8 : vector<1x256xi1> to vector<1x256xi1>
    %85 = vector.broadcast %84 : vector<1x256xi1> to vector<8x256xi1>
    %86 = vector.broadcast %cst_22 : f32 to vector<8x256xf32>
    %87 = arith.select %85, %83, %86 : vector<8x256xi1>, vector<8x256xf32>
    %88 = arith.truncf %87 : vector<8x256xf32> to vector<8x256xbf16>
    %c15_i32_23 = arith.constant 15 : i32
    %89 = tpu.dynamic_rotate %75 by %c15_i32_23 dim 1 : vector<8x256xf32>, i32 -> vector<8x256xf32>
    %90 = arith.andi %8, %14 : vector<1x256xi1>
    %cst_24 = arith.constant 0.000000e+00 : f32
    %91 = vector.shape_cast %90 : vector<1x256xi1> to vector<1x256xi1>
    %92 = vector.broadcast %91 : vector<1x256xi1> to vector<8x256xi1>
    %93 = vector.broadcast %cst_24 : f32 to vector<8x256xf32>
    %94 = arith.select %92, %89, %93 : vector<8x256xi1>, vector<8x256xf32>
    %95 = arith.truncf %94 : vector<8x256xf32> to vector<8x256xbf16>
    %c1_i32_25 = arith.constant 1 : i32
    %96 = tpu.dynamic_rotate %75 by %c1_i32_25 dim 1 : vector<8x256xf32>, i32 -> vector<8x256xf32>
    %cst_26 = arith.constant 0.000000e+00 : f32
    %97 = vector.shape_cast %12 : vector<1x256xi1> to vector<1x256xi1>
    %98 = vector.broadcast %97 : vector<1x256xi1> to vector<8x256xi1>
    %99 = vector.broadcast %cst_26 : f32 to vector<8x256xf32>
    %100 = arith.select %98, %96, %99 : vector<8x256xi1>, vector<8x256xf32>
    %101 = arith.truncf %100 : vector<8x256xf32> to vector<8x256xbf16>
    %102 = arith.truncf %75 : vector<8x256xf32> to vector<8x256xbf16>
    %c255_i32_27 = arith.constant 255 : i32
    %103 = tpu.dynamic_rotate %75 by %c255_i32_27 dim 1 : vector<8x256xf32>, i32 -> vector<8x256xf32>
    %cst_28 = arith.constant 0.000000e+00 : f32
    %104 = vector.shape_cast %14 : vector<1x256xi1> to vector<1x256xi1>
    %105 = vector.broadcast %104 : vector<1x256xi1> to vector<8x256xi1>
    %106 = vector.broadcast %cst_28 : f32 to vector<8x256xf32>
    %107 = arith.select %105, %103, %106 : vector<8x256xi1>, vector<8x256xf32>
    %108 = arith.truncf %107 : vector<8x256xf32> to vector<8x256xbf16>
    %c241_i32_29 = arith.constant 241 : i32
    %109 = tpu.dynamic_rotate %75 by %c241_i32_29 dim 1 : vector<8x256xf32>, i32 -> vector<8x256xf32>
    %110 = arith.andi %10, %12 : vector<1x256xi1>
    %cst_30 = arith.constant 0.000000e+00 : f32
    %111 = vector.shape_cast %110 : vector<1x256xi1> to vector<1x256xi1>
    %112 = vector.broadcast %111 : vector<1x256xi1> to vector<8x256xi1>
    %113 = vector.broadcast %cst_30 : f32 to vector<8x256xf32>
    %114 = arith.select %112, %109, %113 : vector<8x256xi1>, vector<8x256xf32>
    %115 = arith.truncf %114 : vector<8x256xf32> to vector<8x256xbf16>
    %c240_i32_31 = arith.constant 240 : i32
    %116 = tpu.dynamic_rotate %75 by %c240_i32_31 dim 1 : vector<8x256xf32>, i32 -> vector<8x256xf32>
    %cst_32 = arith.constant 0.000000e+00 : f32
    %117 = vector.shape_cast %10 : vector<1x256xi1> to vector<1x256xi1>
    %118 = vector.broadcast %117 : vector<1x256xi1> to vector<8x256xi1>
    %119 = vector.broadcast %cst_32 : f32 to vector<8x256xf32>
    %120 = arith.select %118, %116, %119 : vector<8x256xi1>, vector<8x256xf32>
    %121 = arith.truncf %120 : vector<8x256xf32> to vector<8x256xbf16>
    %c239_i32_33 = arith.constant 239 : i32
    %122 = tpu.dynamic_rotate %75 by %c239_i32_33 dim 1 : vector<8x256xf32>, i32 -> vector<8x256xf32>
    %123 = arith.andi %10, %14 : vector<1x256xi1>
    %cst_34 = arith.constant 0.000000e+00 : f32
    %124 = vector.shape_cast %123 : vector<1x256xi1> to vector<1x256xi1>
    %125 = vector.broadcast %124 : vector<1x256xi1> to vector<8x256xi1>
    %126 = vector.broadcast %cst_34 : f32 to vector<8x256xf32>
    %127 = arith.select %125, %122, %126 : vector<8x256xi1>, vector<8x256xf32>
    %128 = arith.truncf %127 : vector<8x256xf32> to vector<8x256xbf16>
    %129 = tpu.concatenate %82, %88, %95, %101, %102, %108, %115, %121, %128 in 0 : vector<8x256xbf16>, vector<8x256xbf16>, vector<8x256xbf16>, vector<8x256xbf16>, vector<8x256xbf16>, vector<8x256xbf16>, vector<8x256xbf16>, vector<8x256xbf16>, vector<8x256xbf16> -> vector<72x256xbf16>
    %c0_35 = arith.constant 0 : index
    %c0_36 = arith.constant 0 : index
    %130 = vector.load %arg4[%c0_35, %c0_36] : memref<8x72xbf16, #tpu.memory_space<vmem>>, vector<8x72xbf16>
    %cst_37 = arith.constant dense<0.000000e+00> : vector<8x256xf32>
    %131 = tpu.matmul %130, %129, %cst_37 {dimension_numbers = #tpu.dot_dimension_numbers<[1], [0], [0], [1], [0, 0, 1, 1], [], []>} : vector<8x72xbf16>, vector<72x256xbf16>, vector<8x256xf32> -> vector<8x256xf32>
    %c0_38 = arith.constant 0 : index
    %c0_39 = arith.constant 0 : index
    %132 = vector.load %arg5[%c0_38, %c0_39] : memref<8x1xf32, #tpu.memory_space<vmem>>, vector<8x1xf32>
    %133 = vector.broadcast %132 : vector<8x1xf32> to vector<8x256xf32>
    %134 = arith.addf %131, %133 : vector<8x256xf32>
    %c0_40 = arith.constant 0 : index
    %c0_41 = arith.constant 0 : index
    %135 = vector.load %arg6[%c0_40, %c0_41] : memref<8x4xbf16, #tpu.memory_space<vmem>>, vector<8x4xbf16>
    %136 = arith.truncf %1 : vector<4x256xf32> to vector<4x256xbf16>
    %cst_42 = arith.constant dense<0.000000e+00> : vector<8x256xf32>
    %137 = tpu.matmul %135, %136, %cst_42 {dimension_numbers = #tpu.dot_dimension_numbers<[1], [0], [0], [1], [0, 0, 1, 1], [], []>} : vector<8x4xbf16>, vector<4x256xbf16>, vector<8x256xf32> -> vector<8x256xf32>
    %c0_43 = arith.constant 0 : index
    %c0_44 = arith.constant 0 : index
    %138 = vector.load %arg7[%c0_43, %c0_44] : memref<8x1xf32, #tpu.memory_space<vmem>>, vector<8x1xf32>
    %139 = vector.broadcast %138 : vector<8x1xf32> to vector<8x256xf32>
    %140 = arith.addf %137, %139 : vector<8x256xf32>
    %141 = arith.addf %134, %140 : vector<8x256xf32>
    %cst_45 = arith.constant 0.000000e+00 : f32
    %142 = vector.broadcast %cst_45 : f32 to vector<8x256xf32>
    %143 = arith.maximumf %141, %142 : vector<8x256xf32>
    %c0_46 = arith.constant 0 : index
    %c0_47 = arith.constant 0 : index
    %c0_48 = arith.constant 0 : index
    %144 = vector.load %arg8[%c0_46, %c0_47, %c0_48] : memref<1x8x256xf32, #tpu.memory_space<vmem>>, vector<1x8x256xf32>
    %145 = vector.shape_cast %144 : vector<1x8x256xf32> to vector<8x256xf32>
    %146 = vector.shape_cast %143 : vector<8x256xf32> to vector<1x8x256xf32>
    tpu.vector_store %arg8[%c0_46, %c0_47, %c0_48], %146 {strides = array<i32>} : memref<1x8x256xf32, #tpu.memory_space<vmem>>, vector<1x8x256xf32>,
    return
  }
  func.func @transform_0(%arg0: i32) -> (i32, i32, i32) {
    %c0_i32 = arith.constant 0 : i32
    %c0_i32_0 = arith.constant 0 : i32
    %c0_i32_1 = arith.constant 0 : i32
    return %arg0, %c0_i32, %c0_i32_0 : i32, i32, i32
  }
  func.func @transform_1(%arg0: i32) -> (i32, i32) {
    %c0_i32 = arith.constant 0 : i32
    %c0_i32_0 = arith.constant 0 : i32
    %c0_i32_1 = arith.constant 0 : i32
    return %c0_i32, %c0_i32_0 : i32, i32
  }
  func.func @transform_2(%arg0: i32) -> (i32, i32) {
    %c0_i32 = arith.constant 0 : i32
    %c0_i32_0 = arith.constant 0 : i32
    %c0_i32_1 = arith.constant 0 : i32
    return %c0_i32, %c0_i32_0 : i32, i32
  }
  func.func @transform_3(%arg0: i32) -> (i32, i32) {
    %c0_i32 = arith.constant 0 : i32
    %c0_i32_0 = arith.constant 0 : i32
    %c0_i32_1 = arith.constant 0 : i32
    return %c0_i32, %c0_i32_0 : i32, i32
  }
  func.func @transform_4(%arg0: i32) -> (i32, i32) {
    %c0_i32 = arith.constant 0 : i32
    %c0_i32_0 = arith.constant 0 : i32
    %c0_i32_1 = arith.constant 0 : i32
    return %c0_i32, %c0_i32_0 : i32, i32
  }
  func.func @transform_5(%arg0: i32) -> (i32, i32) {
    %c0_i32 = arith.constant 0 : i32
    %c0_i32_0 = arith.constant 0 : i32
    %c0_i32_1 = arith.constant 0 : i32
    return %c0_i32, %c0_i32_0 : i32, i32
  }
  func.func @transform_6(%arg0: i32) -> (i32, i32) {
    %c0_i32 = arith.constant 0 : i32
    %c0_i32_0 = arith.constant 0 : i32
    %c0_i32_1 = arith.constant 0 : i32
    return %c0_i32, %c0_i32_0 : i32, i32
  }
  func.func @transform_7(%arg0: i32) -> (i32, i32, i32) {
    %c0_i32 = arith.constant 0 : i32
    %c0_i32_0 = arith.constant 0 : i32
    %c0_i32_1 = arith.constant 0 : i32
    return %arg0, %c0_i32, %c0_i32_0 : i32, i32, i32
  }
}

</mosaic_0001>

<llo_original>
// kernel: tpu_custom_call.1
$region0: #{tpu_custom_call.1}
  #allocation0 [shape = 'u32[]', space=smem, size = 0x4, offset = 0x4, fixed_abs, tag = 'smem constant byte address 0x4 - core index']
  #allocation1 [shape = 'u32[72,128]{1,0:T(1,128)}', space=vmem, size = 0x9000, scoped, tag = 'internal scratch']
  %s0 = inlined_call_operand.vmem [shape: f32[2,4,256], index: 0, kind: input, shape index: {}]
  %s1 = inlined_call_operand.vmem [shape: bf16[8,36], index: 1, kind: input, shape index: {}]
  %s2 = inlined_call_operand.vmem [shape: f32[8,1], index: 2, kind: input, shape index: {}]
  %s3 = inlined_call_operand.vmem [shape: bf16[8,72], index: 3, kind: input, shape index: {}]
  %s4 = inlined_call_operand.vmem [shape: f32[8,1], index: 4, kind: input, shape index: {}]
  %s5 = inlined_call_operand.vmem [shape: bf16[8,4], index: 5, kind: input, shape index: {}]
  %s6 = inlined_call_operand.vmem [shape: f32[8,1], index: 6, kind: input, shape index: {}]
  %s7 = inlined_call_operand.hbm [shape: f32[2,8,256], index: 7, kind: output, shape index: {}]
  %s8 = sld [smem:[#allocation0]]
  $region61: #{tpu_custom_call.1} parent=0
    _
  %s10 = ssub.s32 1, %s8
  %s11 = scalar_select 0, %s10, %s8
  $region1: #{tpu_custom_call.1} parent=0
    #allocation2 [shape = 'u8[16384]{0}', space=vmem, size = 0x4000, scoped, tag = 'output window, operand 0']
    #allocation3 [shape = 's32[2]{0}', space=sflag, size = 0x8, scoped, tag = 'scoped memory for tpu_custom_call.1']
    %12 = vsyncpa [#allocation3], 0
    %s13 = scalar_lea.sflag [#allocation3], 1
    %14 = vsyncpa %s13, 0
    loop: start=0, step=1, limit=4
    $region2: #{tpu_custom_call.1} parent=1 // loop_pre_header
      _
    $region3: #{tpu_custom_call.1} parent=1 // loop_header
      %s16 = sphi 0, %s20
      %p17 = scmp.ge.s32.totalorder %s16, 4
      %s26 = sphi 0, %s28
      %s29 = sphi 0, %s26
      %s30 = sphi 0, %s29
      %s46 = sphi 0, %s30
      %s50 = sphi 0, %s50
      %s52 = sphi 0, %s50
      %s53 = sphi 0, %s52
      %s67 = sphi 0, %s53
      %s71 = sphi 0, %s71
      %s73 = sphi 0, %s71
      %s74 = sphi 0, %s73
      %s88 = sphi 0, %s74
      %s92 = sphi 0, %s92
      %s94 = sphi 0, %s92
      %s95 = sphi 0, %s94
      %s109 = sphi 0, %s95
      %s113 = sphi 0, %s113
      %s115 = sphi 0, %s113
      %s116 = sphi 0, %s115
      %s130 = sphi 0, %s116
      %s134 = sphi 0, %s134
      %s136 = sphi 0, %s134
      %s137 = sphi 0, %s136
      %s151 = sphi 0, %s137
      %s155 = sphi 0, %s155
      %s157 = sphi 0, %s155
      %s158 = sphi 0, %s157
      %s172 = sphi 0, %s158
      %s178 = sphi 0, %s180
      %s181 = sphi 0, %s178
      %s182 = sphi 0, %s181
      %s198 = sphi 0, %s182
    $region4: #{tpu_custom_call.1} parent=1 // loop_header_branch
      %19 = sbr.rel (%p17) target = $region8
    $region5: #{tpu_custom_call.1} parent=1 // loop_body
      %s21 = ssub.s32 %s16, 1
      %s22 = ssub.s32 %s16, 2
      %s23 = sadd.s32 %s16, 1
      %s24 = ssub.s32 %s16, %s23
      %p25 = scmp.eq.s32.totalorder %s24, 0
      %s27 = sadd.s32 %s26, 1
      %s28 = scalar_select %p25, %s26, %s27
      %p31 = pneg %p25
      %p32 = scmp.eq.s32.totalorder %s16, 1
      %p33 = por %p31, %p32
      %p34 = scmp.ne.s32.totalorder %s26, %s29
      %p35 = scmp.eq.s32.totalorder %s16, 0
      %p36 = por %p34, %p35
      %p37 = scmp.ne.s32.totalorder %s26, %s29
      %p38 = scmp.eq.s32.totalorder %s21, 1
      %p39 = por %p37, %p38
      %p40 = scmp.ne.s32.totalorder %s29, %s30
      %p41 = scmp.eq.s32.totalorder %s21, 0
      %p42 = por %p40, %p41
      %p43 = scmp.ne.s32.totalorder %s29, %s30
      %p44 = scmp.eq.s32.totalorder %s22, 1
      %p45 = por %p43, %p44
      %p47 = scmp.ne.s32.totalorder %s30, %s46
      %p48 = scmp.eq.s32.totalorder %s22, 0
      %p49 = por %p47, %p48
      %s51 = sadd.s32 %s50, 1
      %p54 = scmp.eq.s32.totalorder %s16, 1
      %p55 = scmp.ne.s32.totalorder %s50, %s52
      %p56 = scmp.eq.s32.totalorder %s16, 0
      %p57 = por %p55, %p56
      %p58 = scmp.ne.s32.totalorder %s50, %s52
      %p59 = scmp.eq.s32.totalorder %s21, 1
      %p60 = por %p58, %p59
      %p61 = scmp.ne.s32.totalorder %s52, %s53
      %p62 = scmp.eq.s32.totalorder %s21, 0
      %p63 = por %p61, %p62
      %p64 = scmp.ne.s32.totalorder %s52, %s53
      %p65 = scmp.eq.s32.totalorder %s22, 1
      %p66 = por %p64, %p65
      %p68 = scmp.ne.s32.totalorder %s53, %s67
      %p69 = scmp.eq.s32.totalorder %s22, 0
      %p70 = por %p68, %p69
      %s72 = sadd.s32 %s71, 1
      %p75 = scmp.eq.s32.totalorder %s16, 1
      %p76 = scmp.ne.s32.totalorder %s71, %s73
      %p77 = scmp.eq.s32.totalorder %s16, 0
      %p78 = por %p76, %p77
      %p79 = scmp.ne.s32.totalorder %s71, %s73
      %p80 = scmp.eq.s32.totalorder %s21, 1
      %p81 = por %p79, %p80
      %p82 = scmp.ne.s32.totalorder %s73, %s74
      %p83 = scmp.eq.s32.totalorder %s21, 0
      %p84 = por %p82, %p83
      %p85 = scmp.ne.s32.totalorder %s73, %s74
      %p86 = scmp.eq.s32.totalorder %s22, 1
      %p87 = por %p85, %p86
      %p89 = scmp.ne.s32.totalorder %s74, %s88
      %p90 = scmp.eq.s32.totalorder %s22, 0
      %p91 = por %p89, %p90
      %s93 = sadd.s32 %s92, 1
      %p96 = scmp.eq.s32.totalorder %s16, 1
      %p97 = scmp.ne.s32.totalorder %s92, %s94
      %p98 = scmp.eq.s32.totalorder %s16, 0
      %p99 = por %p97, %p98
      %p100 = scmp.ne.s32.totalorder %s92, %s94
      %p101 = scmp.eq.s32.totalorder %s21, 1
      %p102 = por %p100, %p101
      %p103 = scmp.ne.s32.totalorder %s94, %s95
      %p104 = scmp.eq.s32.totalorder %s21, 0
      %p105 = por %p103, %p104
      %p106 = scmp.ne.s32.totalorder %s94, %s95
      %p107 = scmp.eq.s32.totalorder %s22, 1
      %p108 = por %p106, %p107
      %p110 = scmp.ne.s32.totalorder %s95, %s109
      %p111 = scmp.eq.s32.totalorder %s22, 0
      %p112 = por %p110, %p111
      %s114 = sadd.s32 %s113, 1
      %p117 = scmp.eq.s32.totalorder %s16, 1
      %p118 = scmp.ne.s32.totalorder %s113, %s115
      %p119 = scmp.eq.s32.totalorder %s16, 0
      %p120 = por %p118, %p119
      %p121 = scmp.ne.s32.totalorder %s113, %s115
      %p122 = scmp.eq.s32.totalorder %s21, 1
      %p123 = por %p121, %p122
      %p124 = scmp.ne.s32.totalorder %s115, %s116
      %p125 = scmp.eq.s32.totalorder %s21, 0
      %p126 = por %p124, %p125
      %p127 = scmp.ne.s32.totalorder %s115, %s116
      %p128 = scmp.eq.s32.totalorder %s22, 1
      %p129 = por %p127, %p128
      %p131 = scmp.ne.s32.totalorder %s116, %s130
      %p132 = scmp.eq.s32.totalorder %s22, 0
      %p133 = por %p131, %p132
      %s135 = sadd.s32 %s134, 1
      %p138 = scmp.eq.s32.totalorder %s16, 1
      %p139 = scmp.ne.s32.totalorder %s134, %s136
      %p140 = scmp.eq.s32.totalorder %s16, 0
      %p141 = por %p139, %p140
      %p142 = scmp.ne.s32.totalorder %s134, %s136
      %p143 = scmp.eq.s32.totalorder %s21, 1
      %p144 = por %p142, %p143
      %p145 = scmp.ne.s32.totalorder %s136, %s137
      %p146 = scmp.eq.s32.totalorder %s21, 0
      %p147 = por %p145, %p146
      %p148 = scmp.ne.s32.totalorder %s136, %s137
      %p149 = scmp.eq.s32.totalorder %s22, 1
      %p150 = por %p148, %p149
      %p152 = scmp.ne.s32.totalorder %s137, %s151
      %p153 = scmp.eq.s32.totalorder %s22, 0
      %p154 = por %p152, %p153
      %s156 = sadd.s32 %s155, 1
      %p159 = scmp.eq.s32.totalorder %s16, 1
      %p160 = scmp.ne.s32.totalorder %s155, %s157
      %p161 = scmp.eq.s32.totalorder %s16, 0
      %p162 = por %p160, %p161
      %p163 = scmp.ne.s32.totalorder %s155, %s157
      %p164 = scmp.eq.s32.totalorder %s21, 1
      %p165 = por %p163, %p164
      %p166 = scmp.ne.s32.totalorder %s157, %s158
      %p167 = scmp.eq.s32.totalorder %s21, 0
      %p168 = por %p166, %p167
      %p169 = scmp.ne.s32.totalorder %s157, %s158
      %p170 = scmp.eq.s32.totalorder %s22, 1
      %p171 = por %p169, %p170
      %p173 = scmp.ne.s32.totalorder %s158, %s172
      %p174 = scmp.eq.s32.totalorder %s22, 0
      %p175 = por %p173, %p174
      %s176 = ssub.s32 %s16, %s23
      %p177 = scmp.eq.s32.totalorder %s176, 0
      %s179 = sadd.s32 %s178, 1
      %s180 = scalar_select %p177, %s178, %s179
      %p183 = pneg %p177
      %p184 = scmp.eq.s32.totalorder %s16, 1
      %p185 = por %p183, %p184
      %p186 = scmp.ne.s32.totalorder %s178, %s181
      %p187 = scmp.eq.s32.totalorder %s16, 0
      %p188 = por %p186, %p187
      %p189 = scmp.ne.s32.totalorder %s178, %s181
      %p190 = scmp.eq.s32.totalorder %s21, 1
      %p191 = por %p189, %p190
      %p192 = scmp.ne.s32.totalorder %s181, %s182
      %p193 = scmp.eq.s32.totalorder %s21, 0
      %p194 = por %p192, %p193
      %p195 = scmp.ne.s32.totalorder %s181, %s182
      %p196 = scmp.eq.s32.totalorder %s22, 1
      %p197 = por %p195, %p196
      %p199 = scmp.ne.s32.totalorder %s182, %s198
      %p200 = scmp.eq.s32.totalorder %s22, 0
      %p201 = por %p199, %p200
      %p202 = scmp.le.s32.totalorder 1, %s16
      %p203 = scmp.lt.s32.totalorder %s16, 3
      %p204 = pnand %p202, %p203
      %p205 = pneg %p204
      // Predicated region
      $region9: #{tpu_custom_call.1} parent=5 // pred_check
        _
      $region10: #{tpu_custom_call.1} parent=5 // pred_check_branch
        %207 = sbr.rel (%p204) target = $region12
      $region11: #{tpu_custom_call.1} parent=5 // pred_region
        %s208 = ssub.s32 %s16, 1
        // Predicated region
        $region13: #{tpu_custom_call.1} parent=11 // pred_check
          %p209 = pneg %p63
        $region14: #{tpu_custom_call.1} parent=11 // pred_check_branch
          %211 = sbr.rel (%p209) target = $region16
        $region15: #{tpu_custom_call.1} parent=11 // pred_region
          _
        $region16: #{tpu_custom_call.1} parent=11 // pred_fallthru
          _
        // Predicated region
        $region17: #{tpu_custom_call.1} parent=11 // pred_check
          %p212 = pneg %p84
        $region18: #{tpu_custom_call.1} parent=11 // pred_check_branch
          %214 = sbr.rel (%p212) target = $region20
        $region19: #{tpu_custom_call.1} parent=11 // pred_region
          _
        $region20: #{tpu_custom_call.1} parent=11 // pred_fallthru
          _
        // Predicated region
        $region21: #{tpu_custom_call.1} parent=11 // pred_check
          %p215 = pneg %p105
        $region22: #{tpu_custom_call.1} parent=11 // pred_check_branch
          %217 = sbr.rel (%p215) target = $region24
        $region23: #{tpu_custom_call.1} parent=11 // pred_region
          _
        $region24: #{tpu_custom_call.1} parent=11 // pred_fallthru
          _
        // Predicated region
        $region25: #{tpu_custom_call.1} parent=11 // pred_check
          %p218 = pneg %p126
        $region26: #{tpu_custom_call.1} parent=11 // pred_check_branch
          %220 = sbr.rel (%p218) target = $region28
        $region27: #{tpu_custom_call.1} parent=11 // pred_region
          _
        $region28: #{tpu_custom_call.1} parent=11 // pred_fallthru
          _
        // Predicated region
        $region29: #{tpu_custom_call.1} parent=11 // pred_check
          %p221 = pneg %p147
        $region30: #{tpu_custom_call.1} parent=11 // pred_check_branch
          %223 = sbr.rel (%p221) target = $region32
        $region31: #{tpu_custom_call.1} parent=11 // pred_region
          _
        $region32: #{tpu_custom_call.1} parent=11 // pred_fallthru
          _
        // Predicated region
        $region33: #{tpu_custom_call.1} parent=11 // pred_check
          %p224 = pneg %p168
        $region34: #{tpu_custom_call.1} parent=11 // pred_check_branch
          %226 = sbr.rel (%p224) target = $region36
        $region35: #{tpu_custom_call.1} parent=11 // pred_region
          _
        $region36: #{tpu_custom_call.1} parent=11 // pred_fallthru
          _
      $region12: #{tpu_custom_call.1} parent=5 // pred_fallthru
        _
      %p227 = scmp.lt.s32.totalorder %s16, 2
      // Predicated region
      $region37: #{tpu_custom_call.1} parent=5 // pred_check
        %p228 = pneg %p227
      $region38: #{tpu_custom_call.1} parent=5 // pred_check_branch
        %230 = sbr.rel (%p228) target = $region40
      $region39: #{tpu_custom_call.1} parent=5 // pred_region
        // Predicated region
        $region41: #{tpu_custom_call.1} parent=39 // pred_check
          %p231 = pneg %p36
        $region42: #{tpu_custom_call.1} parent=39 // pred_check_branch
          %233 = sbr.rel (%p231) target = $region44
        $region43: #{tpu_custom_call.1} parent=39 // pred_region
          %p234 = scmp.lt.s32.totalorder %s16, 1
          %s235 = scalar_select %p234, %s16, 1
          %s236 = smul.addr %s235, 2
          %s237 = smul.addr %s236, 4
          %s238 = scalar_lea.vmem %s0, %s237
        $region44: #{tpu_custom_call.1} parent=39 // pred_fallthru
          _
      $region40: #{tpu_custom_call.1} parent=5 // pred_fallthru
        _
      %p239 = scmp.le.s32.totalorder 1, %s16
      %p240 = scmp.lt.s32.totalorder %s16, 3
      %p241 = pnand %p239, %p240
      %p242 = pneg %p241
      // Predicated region
      $region45: #{tpu_custom_call.1} parent=5 // pred_check
        _
      $region46: #{tpu_custom_call.1} parent=5 // pred_check_branch
        %244 = sbr.rel (%p241) target = $region48
      $region47: #{tpu_custom_call.1} parent=5 // pred_region
        %s245 = ssub.s32 %s16, 1
        %p246 = scmp.lt.s32.totalorder %s21, 1
        %s247 = scalar_select %p246, %s21, 1
        %s248 = smul.addr %s247, 2
        %s249 = smul.addr %s248, 4
        %s250 = scalar_lea.vmem %s0, %s249
        %p251 = pneg %p42
        %p252 = pneg %p39
        %p253 = pneg %p63
        %p254 = pneg %p60
        %p255 = pneg %p84
        %p256 = pneg %p81
        %p257 = pneg %p105
        %p258 = pneg %p102
        %p259 = pneg %p126
        %p260 = pneg %p123
        %p261 = pneg %p147
        %p262 = pneg %p144
        %p263 = pneg %p168
        %p264 = pneg %p165
        %p265 = pneg %p194
        %p266 = pneg %p191
        %s267 = sand.u32 %s181, 1
        %s268 = scalar_lea.sflag [#allocation3], %s267
        %s269 = sand.u32 %s181, 1
        %s270 = smul.addr %s269, 16
        %s271 = scalar_lea.vmem [#allocation2], %s270
        %p272 = scmp.lt.s32.totalorder %s21, 1
        %s273 = scalar_select %p272, %s21, 1
        %s274 = smul.addr %s273, 2
        %s275 = smul.addr %s274, 4
        %s276 = scalar_lea.vmem %s0, %s275
        %v278 = vld [vmem:[%s276] sm:$0xff]
        %v279 = vlaneseq
        %v280 = vand.u32 %v279, 127
        %v281 = vadd.s32 %v280, 128
        %v282 = vand.u32 %v280, 15
        %v283 = vand.u32 %v281, 15
        %v284 = vshra.s32 %v280, 4
        %v285 = vshra.s32 %v281, 4
        %vm286 = vcmp.ge.s32.totalorder %v284, 1
        %vm287 = vcmp.ge.s32.totalorder %v285, 1
        %vm288 = vcmp.le.s32.totalorder %v284, 14
        %vm289 = vcmp.le.s32.totalorder %v285, 14
        %vm290 = vcmp.ge.s32.totalorder %v282, 1
        %vm291 = vcmp.ge.s32.totalorder %v283, 1
        %vm292 = vcmp.le.s32.totalorder %v282, 14
        %vm293 = vcmp.le.s32.totalorder %v283, 14
        %295 = vst [vmem:[#allocation1] ss:$2 sm:$0xff] %v278
        %v296 = vld.sshfl [vmem:[#allocation1] sm:$0xff pattern:$0x75316420]
        %v297 = vld.sshfl [vmem:[#allocation1 + $0x8] sm:$0xff pattern:$0x75316420]
        %300 = vrot.lane.b32.xlu0 %v296, 17
        %v301 = vpop.permute.xlu0 %300
        %302 = vrot.lane.b32.xlu0 %v297, 17
        %v303 = vpop.permute.xlu0 %302
        %vm304 = vcmp.lt.s32.totalorder %v280, 17
        %v305 = vsel %vm304, %v301, %v303
        %v306 = vsel %vm304, %v303, %v301
        %vm307 = vmand %vm286, %vm290
        %vm308 = vmand %vm287, %vm291
        %v309 = vsel %vm307, 1, 0
        %v310 = vsel %vm308, 1, 0
        %vm311 = vcmp.eq.s32.totalorder %v309, 1
        %vm312 = vcmp.eq.s32.totalorder %v310, 1
        %v313 = vsel %vm311, %v306, 0.0
        %v314 = vsel %vm312, %v305, 0.0
        %v315 = vpack.c.bf16 %v314, %v313
        %316 = vst [vmem:[#allocation1] ss:$2 sm:$0xff] %v278
        %v317 = vld.sshfl [vmem:[#allocation1] sm:$0xff pattern:$0x75316420]
        %v318 = vld.sshfl [vmem:[#allocation1 + $0x8] sm:$0xff pattern:$0x75316420]
        %321 = vrot.lane.b32.xlu0 %v317, 16
        %v322 = vpop.permute.xlu0 %321
        %323 = vrot.lane.b32.xlu0 %v318, 16
        %v324 = vpop.permute.xlu0 %323
        %vm325 = vcmp.lt.s32.totalorder %v280, 16
        %v326 = vsel %vm325, %v322, %v324
        %v327 = vsel %vm325, %v324, %v322
        %v328 = vsel %vm286, 1, 0
        %v329 = vsel %vm287, 1, 0
        %vm330 = vcmp.eq.s32.totalorder %v328, 1
        %vm331 = vcmp.eq.s32.totalorder %v329, 1
        %v332 = vsel %vm330, %v327, 0.0
        %v333 = vsel %vm331, %v326, 0.0
        %v334 = vpack.c.bf16 %v333, %v332
        %335 = vst [vmem:[#allocation1] ss:$2 sm:$0xff] %v278
        %v336 = vld.sshfl [vmem:[#allocation1] sm:$0xff pattern:$0x75316420]
        %v337 = vld.sshfl [vmem:[#allocation1 + $0x8] sm:$0xff pattern:$0x75316420]
        %340 = vrot.lane.b32.xlu0 %v336, 15
        %v341 = vpop.permute.xlu0 %340
        %342 = vrot.lane.b32.xlu0 %v337, 15
        %v343 = vpop.permute.xlu0 %342
        %vm344 = vcmp.lt.s32.totalorder %v280, 15
        %v345 = vsel %vm344, %v341, %v343
        %v346 = vsel %vm344, %v343, %v341
        %vm347 = vmand %vm286, %vm292
        %vm348 = vmand %vm287, %vm293
        %v349 = vsel %vm347, 1, 0
        %v350 = vsel %vm348, 1, 0
        %vm351 = vcmp.eq.s32.totalorder %v349, 1
        %vm352 = vcmp.eq.s32.totalorder %v350, 1
        %v353 = vsel %vm351, %v346, 0.0
        %v354 = vsel %vm352, %v345, 0.0
        %v355 = vpack.c.bf16 %v354, %v353
        %356 = vst [vmem:[#allocation1] ss:$2 sm:$0xff] %v278
        %v357 = vld.sshfl [vmem:[#allocation1] sm:$0xff pattern:$0x75316420]
        %v358 = vld.sshfl [vmem:[#allocation1 + $0x8] sm:$0xff pattern:$0x75316420]
        %361 = vrot.lane.b32.xlu0 %v357, 1
        %v362 = vpop.permute.xlu0 %361
        %363 = vrot.lane.b32.xlu0 %v358, 1
        %v364 = vpop.permute.xlu0 %363
        %vm365 = vcmp.lt.s32.totalorder %v280, 1
        %v366 = vsel %vm365, %v362, %v364
        %v367 = vsel %vm365, %v364, %v362
        %v368 = vsel %vm290, 1, 0
        %v369 = vsel %vm291, 1, 0
        %vm370 = vcmp.eq.s32.totalorder %v368, 1
        %vm371 = vcmp.eq.s32.totalorder %v369, 1
        %v372 = vsel %vm370, %v367, 0.0
        %v373 = vsel %vm371, %v366, 0.0
        %v374 = vpack.c.bf16 %v373, %v372
        %375 = vst [vmem:[#allocation1] ss:$2 sm:$0xff] %v278
        %v376 = vld.sshfl [vmem:[#allocation1] sm:$0xff pattern:$0x75316420]
        %v377 = vld.sshfl [vmem:[#allocation1 + $0x8] sm:$0xff pattern:$0x75316420]
        %v380 = vpack.c.bf16 %v377, %v376
        %381 = vst [vmem:[#allocation1] ss:$2 sm:$0xff] %v278
        %v382 = vld.sshfl [vmem:[#allocation1] sm:$0xff pattern:$0x75316420]
        %v383 = vld.sshfl [vmem:[#allocation1 + $0x8] sm:$0xff pattern:$0x75316420]
        %386 = vrot.lane.b32.xlu0 %v382, 127
        %v387 = vpop.permute.xlu0 %386
        %388 = vrot.lane.b32.xlu0 %v383, 127
        %v389 = vpop.permute.xlu0 %388
        %vm390 = vcmp.lt.s32.totalorder %v280, 127
        %v391 = vsel %vm390, %v387, %v389
        %v392 = vsel %vm390, %v389, %v387
        %v393 = vsel %vm292, 1, 0
        %v394 = vsel %vm293, 1, 0
        %vm395 = vcmp.eq.s32.totalorder %v393, 1
        %vm396 = vcmp.eq.s32.totalorder %v394, 1
        %v397 = vsel %vm395, %v391, 0.0
        %v398 = vsel %vm396, %v392, 0.0
        %v399 = vpack.c.bf16 %v398, %v397
        %400 = vst [vmem:[#allocation1] ss:$2 sm:$0xff] %v278
        %v401 = vld.sshfl [vmem:[#allocation1] sm:$0xff pattern:$0x75316420]
        %v402 = vld.sshfl [vmem:[#allocation1 + $0x8] sm:$0xff pattern:$0x75316420]
        %405 = vrot.lane.b32.xlu0 %v401, 113
        %v406 = vpop.permute.xlu0 %405
        %407 = vrot.lane.b32.xlu0 %v402, 113
        %v408 = vpop.permute.xlu0 %407
        %vm409 = vcmp.lt.s32.totalorder %v280, 113
        %v410 = vsel %vm409, %v406, %v408
        %v411 = vsel %vm409, %v408, %v406
        %vm412 = vmand %vm288, %vm290
        %vm413 = vmand %vm289, %vm291
        %v414 = vsel %vm412, 1, 0
        %v415 = vsel %vm413, 1, 0
        %vm416 = vcmp.eq.s32.totalorder %v414, 1
        %vm417 = vcmp.eq.s32.totalorder %v415, 1
        %v418 = vsel %vm416, %v410, 0.0
        %v419 = vsel %vm417, %v411, 0.0
        %v420 = vpack.c.bf16 %v419, %v418
        %421 = vst [vmem:[#allocation1] ss:$2 sm:$0xff] %v278
        %v422 = vld.sshfl [vmem:[#allocation1] sm:$0xff pattern:$0x75316420]
        %v423 = vld.sshfl [vmem:[#allocation1 + $0x8] sm:$0xff pattern:$0x75316420]
        %426 = vrot.lane.b32.xlu0 %v422, 112
        %v427 = vpop.permute.xlu0 %426
        %428 = vrot.lane.b32.xlu0 %v423, 112
        %v429 = vpop.permute.xlu0 %428
        %vm430 = vcmp.lt.s32.totalorder %v280, 112
        %v431 = vsel %vm430, %v427, %v429
        %v432 = vsel %vm430, %v429, %v427
        %v433 = vsel %vm288, 1, 0
        %v434 = vsel %vm289, 1, 0
        %vm435 = vcmp.eq.s32.totalorder %v433, 1
        %vm436 = vcmp.eq.s32.totalorder %v434, 1
        %v437 = vsel %vm435, %v431, 0.0
        %v438 = vsel %vm436, %v432, 0.0
        %v439 = vpack.c.bf16 %v438, %v437
        %440 = vst [vmem:[#allocation1] ss:$2 sm:$0xff] %v278
        %v441 = vld.sshfl [vmem:[#allocation1] sm:$0xff pattern:$0x75316420]
        %v442 = vld.sshfl [vmem:[#allocation1 + $0x8] sm:$0xff pattern:$0x75316420]
        %445 = vrot.lane.b32.xlu0 %v441, 111
        %v446 = vpop.permute.xlu0 %445
        %447 = vrot.lane.b32.xlu0 %v442, 111
        %v448 = vpop.permute.xlu0 %447
        %vm449 = vcmp.lt.s32.totalorder %v280, 111
        %v450 = vsel %vm449, %v446, %v448
        %v451 = vsel %vm449, %v448, %v446
        %vm452 = vmand %vm288, %vm292
        %vm453 = vmand %vm289, %vm293
        %v454 = vsel %vm452, 1, 0
        %v455 = vsel %vm453, 1, 0
        %vm456 = vcmp.eq.s32.totalorder %v454, 1
        %vm457 = vcmp.eq.s32.totalorder %v455, 1
        %v458 = vsel %vm456, %v450, 0.0
        %v459 = vsel %vm457, %v451, 0.0
        %v460 = vpack.c.bf16 %v459, %v458
        %v462 = vunpack.c.l.b16 %v315
        %v463 = vunpack.c.h.b16 %v315
        %v464 = vpack.c.b16 %v462, %v462
        %v465 = vpack.c.b16 %v463, %v463
        %v467 = vunpack.c.l.b16 %v334
        %v468 = vunpack.c.h.b16 %v334
        %v469 = vpack.c.b16 %v467, %v467
        %v470 = vpack.c.b16 %v468, %v468
        %v471 = vrot.slane %v469, 6
        %v472 = vrot.slane %v470, 6
        %v474 = vunpack.c.l.b16 %v355
        %v475 = vunpack.c.h.b16 %v355
        %v476 = vpack.c.b16 %v474, %v474
        %v477 = vpack.c.b16 %v475, %v475
        %v479 = vunpack.c.l.b16 %v374
        %v480 = vunpack.c.h.b16 %v374
        %v481 = vpack.c.b16 %v479, %v479
        %v482 = vpack.c.b16 %v480, %v480
        %v483 = vrot.slane %v481, 2
        %v484 = vrot.slane %v482, 2
        %v486 = vunpack.c.l.b16 %v380
        %v487 = vunpack.c.h.b16 %v380
        %v488 = vpack.c.b16 %v486, %v486
        %v489 = vpack.c.b16 %v487, %v487
        %v491 = vunpack.c.l.b16 %v399
        %v492 = vunpack.c.h.b16 %v399
        %v493 = vpack.c.b16 %v491, %v491
        %v494 = vpack.c.b16 %v492, %v492
        %v495 = vrot.slane %v493, 6
        %v496 = vrot.slane %v494, 6
        %v498 = vunpack.c.l.b16 %v420
        %v499 = vunpack.c.h.b16 %v420
        %v500 = vpack.c.b16 %v498, %v498
        %v501 = vpack.c.b16 %v499, %v499
        %v503 = vunpack.c.l.b16 %v439
        %v504 = vunpack.c.h.b16 %v439
        %v505 = vpack.c.b16 %v503, %v503
        %v506 = vpack.c.b16 %v504, %v504
        %v507 = vrot.slane %v505, 2
        %v508 = vrot.slane %v506, 2
        %v510 = vunpack.c.l.b16 %v460
        %v511 = vunpack.c.h.b16 %v460
        %v512 = vpack.c.b16 %v510, %v510
        %v513 = vpack.c.b16 %v511, %v511
        %vm514 = vcmask 1041408
        %v517 = vsel %vm514, %v464, %v471
        %v520 = vsel %vm514, %v465, %v472
        %vm521 = vcmask 1043456
        %v523 = vsel %vm521, %v517, %v476
        %v525 = vsel %vm521, %v520, %v477
        %vm526 = vcmask 1045504
        %v528 = vsel %vm526, %v523, %v483
        %v531 = vsel %vm526, %v525, %v484
        %v535 = vsel %vm514, %v488, %v495
        %v538 = vsel %vm514, %v489, %v496
        %v540 = vsel %vm521, %v535, %v500
        %v542 = vsel %vm521, %v538, %v501
        %v544 = vsel %vm526, %v540, %v507
        %v547 = vsel %vm526, %v542, %v508
        %v549 = vld [vmem:[%s1] sm:$0xf]
        %v550 = vld [vmem:[%s2] sm:$0xff]
        %552 = vset.pattern.permute.xlu0 0
        %553 = vperm.xlu0 %552, %v550
        %v554 = vpop.permute.xlu0 %553
        %vm556 = vcmask 293888
        %v558 = vsel %vm556, %v549, 0
        %v561 = vsel %vm514, %v512, 0
        %v564 = vsel %vm514, %v513, 0
        %566 = vmatpush.bf16.msra.mxu0 0
        %567 = vmatpush.bf16.msra.mxu0 0
        %568 = vmatpush.bf16.msra.mxu0 0
        %569 = vmatpush.bf16.msra.mxu0 0
        %570 = vmatpush.bf16.msra.mxu0 0
        %571 = vmatpush.bf16.msra.mxu0 %v561
        %572 = vmatpush.bf16.msra.mxu0 %v544
        %573 = vmatpush.bf16.msra.mxu0 %v528
        %574 = vmatmul.bf16.gmra.mxu0 %v558
        %v575 = vpop.f32.mrf.mxu0
        %v576 = vadd.f32 %v554, %v575
        %v577 = vpop.f32.mrf.mxu0
        %578 = vdwg.mxu0
        %579 = vmatpush.bf16.msra.mxu0 0
        %580 = vmatpush.bf16.msra.mxu0 0
        %581 = vmatpush.bf16.msra.mxu0 0
        %582 = vmatpush.bf16.msra.mxu0 0
        %583 = vmatpush.bf16.msra.mxu0 0
        %584 = vmatpush.bf16.msra.mxu0 %v564
        %585 = vmatpush.bf16.msra.mxu0 %v547
        %586 = vmatpush.bf16.msra.mxu0 %v531
        %587 = vmatmul.bf16.gmra.mxu0 %v558
        %v588 = vpop.f32.mrf.mxu0
        %v589 = vadd.f32 %v554, %v588
        %v590 = vpop.f32.mrf.mxu0
        %591 = vdwg.mxu0
        %v592 = vmax.f32 %v576, 0.0
        %v593 = vmax.f32 %v589, 0.0
        %594 = vrot.lane.b32.xlu0 %v592, 17
        %v595 = vpop.permute.xlu0 %594
        %596 = vrot.lane.b32.xlu0 %v593, 17
        %v597 = vpop.permute.xlu0 %596
        %v598 = vsel %vm304, %v595, %v597
        %v599 = vsel %vm304, %v597, %v595
        %v600 = vsel %vm311, %v599, 0.0
        %v601 = vsel %vm312, %v598, 0.0
        %v602 = vpack.c.bf16 %v601, %v600
        %603 = vrot.lane.b32.xlu0 %v592, 16
        %v604 = vpop.permute.xlu0 %603
        %605 = vrot.lane.b32.xlu0 %v593, 16
        %v606 = vpop.permute.xlu0 %605
        %v607 = vsel %vm325, %v604, %v606
        %v608 = vsel %vm325, %v606, %v604
        %v609 = vsel %vm330, %v608, 0.0
        %v610 = vsel %vm331, %v607, 0.0
        %v611 = vpack.c.bf16 %v610, %v609
        %612 = vrot.lane.b32.xlu0 %v592, 15
        %v613 = vpop.permute.xlu0 %612
        %614 = vrot.lane.b32.xlu0 %v593, 15
        %v615 = vpop.permute.xlu0 %614
        %v616 = vsel %vm344, %v613, %v615
        %v617 = vsel %vm344, %v615, %v613
        %v618 = vsel %vm351, %v617, 0.0
        %v619 = vsel %vm352, %v616, 0.0
        %v620 = vpack.c.bf16 %v619, %v618
        %621 = vrot.lane.b32.xlu0 %v592, 1
        %v622 = vpop.permute.xlu0 %621
        %623 = vrot.lane.b32.xlu0 %v593, 1
        %v624 = vpop.permute.xlu0 %623
        %v625 = vsel %vm365, %v622, %v624
        %v626 = vsel %vm365, %v624, %v622
        %v627 = vsel %vm370, %v626, 0.0
        %v628 = vsel %vm371, %v625, 0.0
        %v629 = vpack.c.bf16 %v628, %v627
        %v630 = vpack.c.bf16 %v593, %v592
        %631 = vrot.lane.b32.xlu0 %v592, 127
        %v632 = vpop.permute.xlu0 %631
        %633 = vrot.lane.b32.xlu0 %v593, 127
        %v634 = vpop.permute.xlu0 %633
        %v635 = vsel %vm390, %v632, %v634
        %v636 = vsel %vm390, %v634, %v632
        %v637 = vsel %vm395, %v635, 0.0
        %v638 = vsel %vm396, %v636, 0.0
        %v639 = vpack.c.bf16 %v638, %v637
        %640 = vrot.lane.b32.xlu0 %v592, 113
        %v641 = vpop.permute.xlu0 %640
        %642 = vrot.lane.b32.xlu0 %v593, 113
        %v643 = vpop.permute.xlu0 %642
        %v644 = vsel %vm409, %v641, %v643
        %v645 = vsel %vm409, %v643, %v641
        %v646 = vsel %vm416, %v644, 0.0
        %v647 = vsel %vm417, %v645, 0.0
        %v648 = vpack.c.bf16 %v647, %v646
        %649 = vrot.lane.b32.xlu0 %v592, 112
        %v650 = vpop.permute.xlu0 %649
        %651 = vrot.lane.b32.xlu0 %v593, 112
        %v652 = vpop.permute.xlu0 %651
        %v653 = vsel %vm430, %v650, %v652
        %v654 = vsel %vm430, %v652, %v650
        %v655 = vsel %vm435, %v653, 0.0
        %v656 = vsel %vm436, %v654, 0.0
        %v657 = vpack.c.bf16 %v656, %v655
        %658 = vrot.lane.b32.xlu0 %v592, 111
        %v659 = vpop.permute.xlu0 %658
        %660 = vrot.lane.b32.xlu0 %v593, 111
        %v661 = vpop.permute.xlu0 %660
        %v662 = vsel %vm449, %v659, %v661
        %v663 = vsel %vm449, %v661, %v659
        %v664 = vsel %vm456, %v662, 0.0
        %v665 = vsel %vm457, %v663, 0.0
        %v666 = vpack.c.bf16 %v665, %v664
        %v668 = vunpack.c.l.b16 %v602
        %v669 = vunpack.c.h.b16 %v602
        %v670 = vpack.c.b16 %v668, %v668
        %v671 = vpack.c.b16 %v669, %v669
        %v673 = vunpack.c.l.b16 %v611
        %v674 = vunpack.c.h.b16 %v611
        %v675 = vpack.c.b16 %v673, %v673
        %v676 = vpack.c.b16 %v674, %v674
        %v678 = vunpack.c.l.b16 %v620
        %v679 = vunpack.c.h.b16 %v620
        %v680 = vpack.c.b16 %v678, %v678
        %v681 = vpack.c.b16 %v679, %v679
        %v683 = vunpack.c.l.b16 %v629
        %v684 = vunpack.c.h.b16 %v629
        %v685 = vpack.c.b16 %v683, %v683
        %v686 = vpack.c.b16 %v684, %v684
        %v688 = vunpack.c.l.b16 %v630
        %v689 = vunpack.c.h.b16 %v630
        %v690 = vpack.c.b16 %v688, %v688
        %v691 = vpack.c.b16 %v689, %v689
        %v693 = vunpack.c.l.b16 %v639
        %v694 = vunpack.c.h.b16 %v639
        %v695 = vpack.c.b16 %v693, %v693
        %v696 = vpack.c.b16 %v694, %v694
        %v698 = vunpack.c.l.b16 %v648
        %v699 = vunpack.c.h.b16 %v648
        %v700 = vpack.c.b16 %v698, %v698
        %v701 = vpack.c.b16 %v699, %v699
        %v703 = vunpack.c.l.b16 %v657
        %v704 = vunpack.c.h.b16 %v657
        %v705 = vpack.c.b16 %v703, %v703
        %v706 = vpack.c.b16 %v704, %v704
        %v708 = vunpack.c.l.b16 %v666
        %v709 = vunpack.c.h.b16 %v666
        %v710 = vpack.c.b16 %v708, %v708
        %v711 = vpack.c.b16 %v709, %v709
        %v714 = vsel %vm521, %v670, %v675
        %v718 = vsel %vm521, %v671, %v676
        %v722 = vsel %vm521, %v680, %v685
        %v726 = vsel %vm521, %v681, %v686
        %v730 = vsel %vm521, %v690, %v695
        %v734 = vsel %vm521, %v691, %v696
        %v738 = vsel %vm521, %v700, %v705
        %v742 = vsel %vm521, %v701, %v706
        %v744 = vld [vmem:[%s3] sm:$0xf]
        %v745 = vld [vmem:[%s4] sm:$0xff]
        %747 = vset.pattern.permute.xlu0 0
        %748 = vperm.xlu0 %747, %v745
        %v749 = vpop.permute.xlu0 %748
        %vm751 = vcmask 588800
        %v753 = vsel %vm751, %v744, 0
        %v756 = vsel %vm521, %v710, 0
        %v759 = vsel %vm521, %v711, 0
        %761 = vmatpush.bf16.msra.mxu0 0
        %762 = vmatpush.bf16.msra.mxu0 0
        %763 = vmatpush.bf16.msra.mxu0 0
        %764 = vmatpush.bf16.msra.mxu0 %v756
        %765 = vmatpush.bf16.msra.mxu0 %v738
        %766 = vmatpush.bf16.msra.mxu0 %v730
        %767 = vmatpush.bf16.msra.mxu0 %v722
        %768 = vmatpush.bf16.msra.mxu0 %v714
        %769 = vmatmul.bf16.gmra.mxu0 %v753
        %v770 = vpop.f32.mrf.mxu0
        %v771 = vadd.f32 %v749, %v770
        %v772 = vpop.f32.mrf.mxu0
        %773 = vdwg.mxu0
        %774 = vmatpush.bf16.msra.mxu0 0
        %775 = vmatpush.bf16.msra.mxu0 0
        %776 = vmatpush.bf16.msra.mxu0 0
        %777 = vmatpush.bf16.msra.mxu0 %v759
        %778 = vmatpush.bf16.msra.mxu0 %v742
        %779 = vmatpush.bf16.msra.mxu0 %v734
        %780 = vmatpush.bf16.msra.mxu0 %v726
        %781 = vmatpush.bf16.msra.mxu0 %v718
        %782 = vmatmul.bf16.gmra.mxu0 %v753
        %v783 = vpop.f32.mrf.mxu0
        %v784 = vadd.f32 %v749, %v783
        %v785 = vpop.f32.mrf.mxu0
        %786 = vdwg.mxu0
        %v787 = vld [vmem:[%s5] sm:$0xf]
        %v788 = vld [vmem:[%s6] sm:$0xff]
        %790 = vset.pattern.permute.xlu0 0
        %791 = vperm.xlu0 %790, %v788
        %v792 = vpop.permute.xlu0 %791
        %vm794 = vcmask 31744
        %v796 = vsel %vm794, %v787, 0
        %v798 = vsel %vm514, %v488, 0
        %v800 = vsel %vm514, %v489, 0
        %802 = vmatpush.bf16.msra.mxu0 0
        %803 = vmatpush.bf16.msra.mxu0 0
        %804 = vmatpush.bf16.msra.mxu0 0
        %805 = vmatpush.bf16.msra.mxu0 0
        %806 = vmatpush.bf16.msra.mxu0 0
        %807 = vmatpush.bf16.msra.mxu0 0
        %808 = vmatpush.bf16.msra.mxu0 0
        %809 = vmatpush.bf16.msra.mxu0 %v798
        %810 = vmatmul.bf16.gmra.mxu0 %v796
        %v811 = vpop.f32.mrf.mxu0
        %v812 = vadd.f32 %v792, %v811
        %v813 = vpop.f32.mrf.mxu0
        %814 = vdwg.mxu0
        %815 = vmatpush.bf16.msra.mxu0 0
        %816 = vmatpush.bf16.msra.mxu0 0
        %817 = vmatpush.bf16.msra.mxu0 0
        %818 = vmatpush.bf16.msra.mxu0 0
        %819 = vmatpush.bf16.msra.mxu0 0
        %820 = vmatpush.bf16.msra.mxu0 0
        %821 = vmatpush.bf16.msra.mxu0 0
        %822 = vmatpush.bf16.msra.mxu0 %v800
        %823 = vmatmul.bf16.gmra.mxu0 %v796
        %v824 = vpop.f32.mrf.mxu0
        %v825 = vadd.f32 %v792, %v824
        %v826 = vpop.f32.mrf.mxu0
        %827 = vdwg.mxu0
        %v828 = vadd.f32 %v771, %v812
        %v829 = vadd.f32 %v784, %v825
        %v830 = vmax.f32 %v828, 0.0
        %v831 = vmax.f32 %v829, 0.0
        %832 = vst [vmem:[%s271] sm:$0xff] %v830
        %833 = vst [vmem:[%s271 + $0x8] sm:$0xff] %v831
        %s834 = sand.u32 %s181, 1
        %s835 = scalar_lea.sflag [#allocation3], %s834
        %s836 = sand.u32 %s181, 1
        %s837 = smul.addr %s836, 16
        %s838 = scalar_lea.vmem [#allocation2], %s837
        // Predicated region
        $region49: #{tpu_custom_call.1} parent=47 // pred_check
          %p839 = pneg %p191
        $region50: #{tpu_custom_call.1} parent=47 // pred_check_branch
          %841 = sbr.rel (%p839) target = $region52
        $region51: #{tpu_custom_call.1} parent=47 // pred_region
          %843 = vsyncadd %s835, 0
          %s844 = smul.addr %s21, 2
          %s845 = smul.addr %s844, 8
          %s846 = scalar_lea.hbm %s7, %s845
          %s848 = sshll.u32 %s838, 4
          %s849 = int_to_ptr.vmem [resolvable:$true] %s848
          %s850 = sshll.u32 %s846, 4
          %s851 = int_to_ptr.hbm [resolvable:$true] %s850
          %853 = dma.vmem_to_hbm [thread:$0]  %s849, 256, %s851, %s835
        $region52: #{tpu_custom_call.1} parent=47 // pred_fallthru
          _
      $region48: #{tpu_custom_call.1} parent=5 // pred_fallthru
        _
      %p854 = scmp.le.s32.totalorder 2, %s16
      // Predicated region
      $region53: #{tpu_custom_call.1} parent=5 // pred_check
        %p855 = pneg %p854
      $region54: #{tpu_custom_call.1} parent=5 // pred_check_branch
        %857 = sbr.rel (%p855) target = $region56
      $region55: #{tpu_custom_call.1} parent=5 // pred_region
        %s858 = ssub.s32 %s16, 2
        // Predicated region
        $region57: #{tpu_custom_call.1} parent=55 // pred_check
          %p859 = pneg %p197
        $region58: #{tpu_custom_call.1} parent=55 // pred_check_branch
          %861 = sbr.rel (%p859) target = $region60
        $region59: #{tpu_custom_call.1} parent=55 // pred_region
          %s862 = sand.u32 %s182, 1
          %s863 = scalar_lea.sflag [#allocation3], %s862
          %s864 = sand.u32 %s182, 1
          %s865 = smul.addr %s864, 16
          %s866 = scalar_lea.vmem [#allocation2], %s865
          %868 = dma.done %s863, 256
        $region60: #{tpu_custom_call.1} parent=55 // pred_fallthru
          _
      $region56: #{tpu_custom_call.1} parent=5 // pred_fallthru
        _
    $region6: #{tpu_custom_call.1} parent=1 // loop_footer
      %s20 = sadd.s32 1, %s16
    $region7: #{tpu_custom_call.1} parent=1 // loop_footer_branch
      %15 = sbr.rel target = $region3
    $region8: #{tpu_custom_call.1} parent=1 // loop_exit
      _
    %869 = vsyncpa [#allocation3], 1
    %s870 = scalar_lea.sflag [#allocation3], 1
    %871 = vsyncpa %s870, 1

</llo_original>
